<compile_context>
chip_gen: v7x
topology: tpu7x:2x2x1
jax: 0.10.0
libtpu: 0.0.40
codegen_flags: <defaults>
</compile_context>

<pallas_src>
import math

import jax
import jax.numpy as jnp
from jax.experimental import pallas as pl
from jax.experimental.pallas import tpu as pltpu

K = 3  # temporal kernel size (kernel_size=3 in TimeBlock)


def time_block_kernel(x_ref, w13_ref, w2_ref, b13_ref, b2_ref, out_ref):
    """One row-tile of the fused TimeBlock.

    x_ref   : (rows, pack*K*Cin)     bf16  im2col slab, `pack` logical rows per matmul row
    w13_ref : (pack*K*Cin, pack*Cout) bf16  kron(I_pack, W1 + W3)   (resident)
    w2_ref  : (pack*K*Cin, pack*Cout) bf16  kron(I_pack, W2)        (resident)
    b13_ref : (1, pack*Cout)         f32   tiled b1 + b3
    b2_ref  : (1, pack*Cout)         f32   tiled b2
    out_ref : (rows, pack*Cout)      f32   lane-dense (128-wide) output slab
    """
    x = x_ref[...]
    y13 = jnp.dot(x, w13_ref[...],
                  preferred_element_type=jnp.float32) + b13_ref[...]
    y2 = jnp.dot(x, w2_ref[...],
                 preferred_element_type=jnp.float32) + b2_ref[...]
    # relu(conv1 + sigmoid(conv2) + conv3); identical lane layout -> pure VPU/EUP
    out_ref[...] = jnp.maximum(y13 + jax.nn.sigmoid(y2), 0.0).astype(out_ref.dtype)


def _round_up(x, m):
    return ((x + m - 1) // m) * m


def time_block_forward(X, params, *, row_block=512):
    """X: (B, N, T, Cin) -> (B, N, T-K+1, Cout), matching TimeBlock.forward."""
    B, N, T, Cin = X.shape
    Cout = params["w1"].shape[-1]
    Tout = T - K + 1
    M = B * N * Tout                       # total logical output rows (b, n, t)

    # Pack `pack` logical rows per matmul row so the output lane width is a
    # multiple of 128 (unmasked stores).  Falls back to pack=1 if Cout ∤ 128.
    pack = 128 // Cout if (Cout <= 128 and 128 % Cout == 0) else 1
    lane = pack * Cout
    kdim = pack * K * Cin

    # ---- wrapper-side im2col: pure layout plumbing, fused by XLA ----
    slab = jnp.concatenate([X[:, :, k:k + Tout, :] for k in range(K)], axis=-1)
    slab = slab.reshape(M, K * Cin)        # slab[row, k*Cin + c] = X[b, n, t+k, c]

    # Row padding / tiling: one invocation when small; 512-packed-row tiles
    # (multiple of 16 for bf16 sublanes) when large enough to split across TCs.
    rows_needed = -(-M // pack)
    if rows_needed <= row_block:
        block_rows = _round_up(rows_needed, 16)
        rows_padded = block_rows
    else:
        block_rows = row_block
        rows_padded = _round_up(rows_needed, block_rows)
    M_pad = rows_padded * pack
    if M_pad > M:
        slab = jnp.pad(slab, ((0, M_pad - M), (0, 0)))
    packed = slab.reshape(rows_padded, kdim).astype(jnp.bfloat16)

    # ---- fold conv1+conv3 by linearity; block-diagonalize for row packing ----
    eye = jnp.eye(pack, dtype=jnp.float32)
    w13 = jnp.kron(eye, (params["w1"] + params["w3"]).reshape(K * Cin, Cout))
    w2 = jnp.kron(eye, params["w2"].reshape(K * Cin, Cout))
    w13 = w13.astype(jnp.bfloat16)
    w2 = w2.astype(jnp.bfloat16)
    b13 = jnp.tile(params["b1"] + params["b3"], (1, pack)).astype(jnp.float32)
    b2 = jnp.tile(params["b2"], (1, pack)).astype(jnp.float32)

    grid = (rows_padded // block_rows,)
    out = pl.pallas_call(
        time_block_kernel,
        out_shape=jax.ShapeDtypeStruct((rows_padded, lane), jnp.float32),
        grid=grid,
        in_specs=[
            pl.BlockSpec((block_rows, kdim), lambda i: (i, 0)),
            pl.BlockSpec((kdim, lane), lambda i: (0, 0)),   # resident weights
            pl.BlockSpec((kdim, lane), lambda i: (0, 0)),
            pl.BlockSpec((1, lane), lambda i: (0, 0)),
            pl.BlockSpec((1, lane), lambda i: (0, 0)),
        ],
        out_specs=pl.BlockSpec((block_rows, lane), lambda i: (i, 0)),
        compiler_params=pltpu.CompilerParams(
            dimension_semantics=("parallel",)),
    )(packed, w13, w2, b13, b2)

    # Unpack rows, drop padding, restore (B, N, Tout, Cout).
    return out.reshape(rows_padded * pack, Cout)[:M].reshape(B, N, Tout, Cout)


def time_block_reference(X, params):
    """Pure-JAX f32 reference, numerically mirrors the PyTorch TimeBlock."""
    B, N, T, Cin = X.shape
    Cout = params["w1"].shape[-1]
    Tout = T - K + 1

    def conv(w, b):
        acc = jnp.zeros((B, N, Tout, Cout), jnp.float32)
        for k in range(K):
            acc = acc + jnp.einsum("bntc,co->bnto",
                                   X[:, :, k:k + Tout, :], w[k],
                                   preferred_element_type=jnp.float32)
        return acc + b.reshape(1, 1, 1, Cout)

    c1 = conv(params["w1"], params["b1"])
    c2 = conv(params["w2"], params["b2"])
    c3 = conv(params["w3"], params["b3"])
    return jnp.maximum(c1 + jax.nn.sigmoid(c2) + c3, 0.0)


def init_params(key, in_channels, out_channels):
    """Synthetic parameters matching PyTorch Conv2d default init bounds."""
    ks = jax.random.split(key, 6)
    bound = 1.0 / math.sqrt(in_channels * K)   # fan_in = Cin * 1 * K

    def conv_w(k):
        return jax.random.uniform(k, (K, in_channels, out_channels),
                                  jnp.float32, -bound, bound)

    def conv_b(k):
        return jax.random.uniform(k, (1, out_channels),
                                  jnp.float32, -bound, bound)

    return {
        "w1": conv_w(ks[0]), "b1": conv_b(ks[1]),
        "w2": conv_w(ks[2]), "b2": conv_b(ks[3]),
        "w3": conv_w(ks[4]), "b3": conv_b(ks[5]),
    }


if __name__ == "__main__":
    B, N, T = 2, 16, 8          # batch, num_nodes, num_timesteps
    Cin, Cout = 4, 32           # in_channels, out_channels

    key = jax.random.PRNGKey(0)
    kx, kp = jax.random.split(key, 2)

    X = jax.random.normal(kx, (B, N, T, Cin), jnp.float32)
    params = init_params(kp, Cin, Cout)

    out = time_block_forward(X, params)
    out = jax.block_until_ready(out)

    assert out.shape == (B, N, T - K + 1, Cout), out.shape
    assert bool(jnp.all(jnp.isfinite(out)))

    ref = time_block_reference(X, params)
    # tolerance sized for bf16 MXU operands (f32 accumulation / activations)
    assert bool(jnp.allclose(out, ref, rtol=5e-2, atol=5e-2)), (
        float(jnp.max(jnp.abs(out - ref))))

    print("KERNEL_OK")
</pallas_src>

<mosaic_0001>
module attributes {stable_mosaic.version = 11 : i64} {
  func.func @time_block_kernel(%arg0: i32, %arg1: memref<48x48xbf16, #tpu.memory_space<vmem>>, %arg2: memref<48x128xbf16, #tpu.memory_space<vmem>>, %arg3: memref<48x128xbf16, #tpu.memory_space<vmem>>, %arg4: memref<1x128xf32, #tpu.memory_space<vmem>>, %arg5: memref<1x128xf32, #tpu.memory_space<vmem>>, %arg6: memref<48x128xf32, #tpu.memory_space<vmem>>) attributes {dimension_semantics = [#tpu.dimension_semantics<parallel>], iteration_bounds = array<i64: 1>, scalar_prefetch = 0 : i64, scratch_operands = 0 : i64, tpu.core_type = #tpu.core_type<tc>, window_params = [{transform_indices = @transform_0, window_bounds = array<i64: 48, 48>}, {pipeline_mode = #tpu.pipeline_mode<synchronous>, transform_indices = @transform_1, window_bounds = array<i64: 48, 128>}, {pipeline_mode = #tpu.pipeline_mode<synchronous>, transform_indices = @transform_2, window_bounds = array<i64: 48, 128>}, {pipeline_mode = #tpu.pipeline_mode<synchronous>, transform_indices = @transform_3, window_bounds = array<i64: 1, 128>}, {pipeline_mode = #tpu.pipeline_mode<synchronous>, transform_indices = @transform_4, window_bounds = array<i64: 1, 128>}, {transform_indices = @transform_5, window_bounds = array<i64: 48, 128>}]} {
    %c0 = arith.constant 0 : index
    %c0_0 = arith.constant 0 : index
    %0 = vector.load %arg1[%c0, %c0_0] : memref<48x48xbf16, #tpu.memory_space<vmem>>, vector<48x48xbf16>
    %c0_1 = arith.constant 0 : index
    %c0_2 = arith.constant 0 : index
    %1 = vector.load %arg2[%c0_1, %c0_2] : memref<48x128xbf16, #tpu.memory_space<vmem>>, vector<48x128xbf16>
    %cst = arith.constant dense<0.000000e+00> : vector<48x128xf32>
    %2 = tpu.matmul %0, %1, %cst {dimension_numbers = #tpu.dot_dimension_numbers<[1], [0], [0], [1], [0, 0, 1, 1], [], []>} : vector<48x48xbf16>, vector<48x128xbf16>, vector<48x128xf32> -> vector<48x128xf32>
    %c0_3 = arith.constant 0 : index
    %c0_4 = arith.constant 0 : index
    %3 = vector.load %arg4[%c0_3, %c0_4] : memref<1x128xf32, #tpu.memory_space<vmem>>, vector<1x128xf32>
    %4 = vector.broadcast %3 : vector<1x128xf32> to vector<48x128xf32>
    %5 = arith.addf %2, %4 : vector<48x128xf32>
    %c0_5 = arith.constant 0 : index
    %c0_6 = arith.constant 0 : index
    %6 = vector.load %arg3[%c0_5, %c0_6] : memref<48x128xbf16, #tpu.memory_space<vmem>>, vector<48x128xbf16>
    %cst_7 = arith.constant dense<0.000000e+00> : vector<48x128xf32>
    %7 = tpu.matmul %0, %6, %cst_7 {dimension_numbers = #tpu.dot_dimension_numbers<[1], [0], [0], [1], [0, 0, 1, 1], [], []>} : vector<48x48xbf16>, vector<48x128xbf16>, vector<48x128xf32> -> vector<48x128xf32>
    %c0_8 = arith.constant 0 : index
    %c0_9 = arith.constant 0 : index
    %8 = vector.load %arg5[%c0_8, %c0_9] : memref<1x128xf32, #tpu.memory_space<vmem>>, vector<1x128xf32>
    %9 = vector.broadcast %8 : vector<1x128xf32> to vector<48x128xf32>
    %10 = arith.addf %7, %9 : vector<48x128xf32>
    %11 = arith.negf %10 : vector<48x128xf32>
    %12 = math.exp %11 : vector<48x128xf32>
    %cst_10 = arith.constant 1.000000e+00 : f32
    %13 = vector.broadcast %cst_10 : f32 to vector<48x128xf32>
    %14 = arith.addf %13, %12 : vector<48x128xf32>
    %15 = arith.divf %13, %14 : vector<48x128xf32>
    %16 = arith.addf %5, %15 : vector<48x128xf32>
    %cst_11 = arith.constant 0.000000e+00 : f32
    %17 = vector.broadcast %cst_11 : f32 to vector<48x128xf32>
    %18 = arith.maximumf %16, %17 : vector<48x128xf32>
    %c0_12 = arith.constant 0 : index
    %c0_13 = arith.constant 0 : index
    %19 = vector.load %arg6[%c0_12, %c0_13] : memref<48x128xf32, #tpu.memory_space<vmem>>, vector<48x128xf32>
    tpu.vector_store %arg6[%c0_12, %c0_13], %18 {strides = array<i32>} : memref<48x128xf32, #tpu.memory_space<vmem>>, vector<48x128xf32>,
    return
  }
  func.func @transform_0(%arg0: i32) -> (i32, i32) {
    %c0_i32 = arith.constant 0 : i32
    %c0_i32_0 = arith.constant 0 : i32
    return %arg0, %c0_i32 : i32, i32
  }
  func.func @transform_1(%arg0: i32) -> (i32, i32) {
    %c0_i32 = arith.constant 0 : i32
    %c0_i32_0 = arith.constant 0 : i32
    %c0_i32_1 = arith.constant 0 : i32
    return %c0_i32, %c0_i32_0 : i32, i32
  }
  func.func @transform_2(%arg0: i32) -> (i32, i32) {
    %c0_i32 = arith.constant 0 : i32
    %c0_i32_0 = arith.constant 0 : i32
    %c0_i32_1 = arith.constant 0 : i32
    return %c0_i32, %c0_i32_0 : i32, i32
  }
  func.func @transform_3(%arg0: i32) -> (i32, i32) {
    %c0_i32 = arith.constant 0 : i32
    %c0_i32_0 = arith.constant 0 : i32
    %c0_i32_1 = arith.constant 0 : i32
    return %c0_i32, %c0_i32_0 : i32, i32
  }
  func.func @transform_4(%arg0: i32) -> (i32, i32) {
    %c0_i32 = arith.constant 0 : i32
    %c0_i32_0 = arith.constant 0 : i32
    %c0_i32_1 = arith.constant 0 : i32
    return %c0_i32, %c0_i32_0 : i32, i32
  }
  func.func @transform_5(%arg0: i32) -> (i32, i32) {
    %c0_i32 = arith.constant 0 : i32
    %c0_i32_0 = arith.constant 0 : i32
    return %arg0, %c0_i32 : i32, i32
  }
}

</mosaic_0001>

<llo_original>
// kernel: tpu_custom_call.1
$region0: #{tpu_custom_call.1}
  #allocation0 [shape = 'u32[]', space=smem, size = 0x4, offset = 0x4, fixed_abs, tag = 'smem constant byte address 0x4 - core index']
  #allocation1 [shape = 'u32[144,128]{1,0:T(1,128)}', space=vmem, size = 0x12000, scoped, tag = 'internal scratch']
  %s0 = inlined_call_operand.hbm [shape: bf16[48,48], index: 0, kind: input, shape index: {}]
  %s1 = inlined_call_operand.hbm [shape: bf16[48,128], index: 1, kind: input, shape index: {}]
  %s2 = inlined_call_operand.hbm [shape: bf16[48,128], index: 2, kind: input, shape index: {}]
  %s3 = inlined_call_operand.vmem [shape: f32[1,128], index: 3, kind: input, shape index: {}]
  %s4 = inlined_call_operand.vmem [shape: f32[1,128], index: 4, kind: input, shape index: {}]
  %s5 = inlined_call_operand.hbm [shape: f32[48,128], index: 5, kind: output, shape index: {}]
  %s6 = sld [smem:[#allocation0]]
  $region42: #{tpu_custom_call.1} parent=0
    _
  %s8 = ssub.s32 1, %s6
  %s9 = scalar_select 0, %s8, %s6
  $region1: #{tpu_custom_call.1} parent=0
    #allocation2 [shape = 'u8[12288]{0}', space=vmem, size = 0x3000, scoped, tag = 'input window, operand 0, single buffered']
    #allocation3 [shape = 's32[1]{0}', space=sflag, size = 0x4, scoped, tag = 'scoped memory for tpu_custom_call.1']
    #allocation4 [shape = 's32[1]{0}', space=sflag, size = 0x4, scoped, tag = 'scoped memory for tpu_custom_call.1']
    #allocation5 [shape = 'u8[12288]{0}', space=vmem, size = 0x3000, scoped, tag = 'input window, operand 1, single buffered']
    #allocation6 [shape = 's32[1]{0}', space=sflag, size = 0x4, scoped, tag = 'scoped memory for tpu_custom_call.1']
    #allocation7 [shape = 'u8[12288]{0}', space=vmem, size = 0x3000, scoped, tag = 'input window, operand 2, single buffered']
    #allocation8 [shape = 'u8[24576]{0}', space=vmem, size = 0x6000, scoped, tag = 'output window, operand 0, single buffered']
    %10 = vsyncpa [#allocation3], 0
    %11 = vsyncpa [#allocation6], 0
    %12 = vsyncpa [#allocation4], 0
    // Predicated region
    $region2: #{tpu_custom_call.1} parent=1 // pred_check
      _
    $region3: #{tpu_custom_call.1} parent=1 // pred_check_branch
      %14 = sbr.rel (0) target = $region5
    $region4: #{tpu_custom_call.1} parent=1 // pred_region
      %s16 = ssub.s32 384, 384
      %17 = vsyncadd [#allocation3], %s16
      %s18 = sshll.u32 [#allocation2], 4
      %s19 = int_to_ptr.vmem [resolvable:$true] %s18
      %24 = dma.hbm_to_vmem [thread:$0]  %s0, 384, %s19, [#allocation3], 64, 64, 4
    $region5: #{tpu_custom_call.1} parent=1 // pred_fallthru
      _
    // Predicated region
    $region6: #{tpu_custom_call.1} parent=1 // pred_check
      _
    $region7: #{tpu_custom_call.1} parent=1 // pred_check_branch
      %26 = sbr.rel (0) target = $region9
    $region8: #{tpu_custom_call.1} parent=1 // pred_region
      %s28 = ssub.s32 384, 384
      %29 = vsyncadd [#allocation6], %s28
      %s30 = sshll.u32 [#allocation5], 4
      %s31 = int_to_ptr.vmem [resolvable:$true] %s30
      %36 = dma.hbm_to_vmem [thread:$0]  %s1, 384, %s31, [#allocation6], 64, 64, 4
    $region9: #{tpu_custom_call.1} parent=1 // pred_fallthru
      _
    // Predicated region
    $region10: #{tpu_custom_call.1} parent=1 // pred_check
      _
    $region11: #{tpu_custom_call.1} parent=1 // pred_check_branch
      %38 = sbr.rel (0) target = $region13
    $region12: #{tpu_custom_call.1} parent=1 // pred_region
      %s40 = ssub.s32 384, 384
      %41 = vsyncadd [#allocation6], %s40
      %s42 = sshll.u32 [#allocation7], 4
      %s43 = int_to_ptr.vmem [resolvable:$true] %s42
      %48 = dma.hbm_to_vmem [thread:$0]  %s2, 384, %s43, [#allocation6], 64, 64, 4
    $region13: #{tpu_custom_call.1} parent=1 // pred_fallthru
      _
    // Predicated region
    $region14: #{tpu_custom_call.1} parent=1 // pred_check
      _
    $region15: #{tpu_custom_call.1} parent=1 // pred_check_branch
      %50 = sbr.rel (0) target = $region17
    $region16: #{tpu_custom_call.1} parent=1 // pred_region
      _
    $region17: #{tpu_custom_call.1} parent=1 // pred_fallthru
      _
    // Predicated region
    $region18: #{tpu_custom_call.1} parent=1 // pred_check
      _
    $region19: #{tpu_custom_call.1} parent=1 // pred_check_branch
      %52 = sbr.rel (0) target = $region21
    $region20: #{tpu_custom_call.1} parent=1 // pred_region
      _
    $region21: #{tpu_custom_call.1} parent=1 // pred_fallthru
      _
    // Predicated region
    $region22: #{tpu_custom_call.1} parent=1 // pred_check
      _
    $region23: #{tpu_custom_call.1} parent=1 // pred_check_branch
      %54 = sbr.rel (0) target = $region25
    $region24: #{tpu_custom_call.1} parent=1 // pred_region
      %55 = dma.done [#allocation3], 384
    $region25: #{tpu_custom_call.1} parent=1 // pred_fallthru
      _
    // Predicated region
    $region26: #{tpu_custom_call.1} parent=1 // pred_check
      _
    $region27: #{tpu_custom_call.1} parent=1 // pred_check_branch
      %57 = sbr.rel (0) target = $region29
    $region28: #{tpu_custom_call.1} parent=1 // pred_region
      %58 = dma.done [#allocation6], 384
    $region29: #{tpu_custom_call.1} parent=1 // pred_fallthru
      _
    // Predicated region
    $region30: #{tpu_custom_call.1} parent=1 // pred_check
      _
    $region31: #{tpu_custom_call.1} parent=1 // pred_check_branch
      %60 = sbr.rel (0) target = $region33
    $region32: #{tpu_custom_call.1} parent=1 // pred_region
      %61 = dma.done [#allocation6], 384
    $region33: #{tpu_custom_call.1} parent=1 // pred_fallthru
      _
    %v63 = vld [vmem:[#allocation2] sm:$0xf]
    %v64 = vld [vmem:[#allocation2 + $0x4] sm:$0xf]
    %v65 = vld [vmem:[#allocation2 + $0x8] sm:$0xf]
    %v66 = vld [vmem:[#allocation2 + $0xc] sm:$0xf]
    %v67 = vld [vmem:[#allocation2 + $0x10] sm:$0xf]
    %v68 = vld [vmem:[#allocation2 + $0x14] sm:$0xf]
    %v69 = vld [vmem:[#allocation5] sm:$0xf]
    %v70 = vld [vmem:[#allocation5 + $0x4] sm:$0xf]
    %v71 = vld [vmem:[#allocation5 + $0x8] sm:$0xf]
    %v72 = vld [vmem:[#allocation5 + $0xc] sm:$0xf]
    %v73 = vld [vmem:[#allocation5 + $0x10] sm:$0xf]
    %v74 = vld [vmem:[#allocation5 + $0x14] sm:$0xf]
    %v75 = vld [vmem:[%s3] sm:$0x1]
    %v77 = vlaneseq
    %v78 = vshrl.u32 %v77, 7
    %v79 = vsub.s32 0, %v78
    %v80 = vrot.slane %v75, %v79
    %v88 = vunpack.c.l.b16 %v63
    %v89 = vunpack.c.l.b16 %v64
    %v90 = vunpack.c.l.b16 %v65
    %v91 = vunpack.c.l.b16 %v66
    %v92 = vunpack.c.l.b16 %v67
    %v93 = vunpack.c.l.b16 %v68
    %v94 = vpack.c.b16 %v89, %v88
    %v95 = vpack.c.b16 %v91, %v90
    %v96 = vpack.c.b16 %v93, %v92
    %v103 = vunpack.c.l.b16 %v69
    %v104 = vunpack.c.l.b16 %v70
    %v105 = vunpack.c.l.b16 %v71
    %v106 = vunpack.c.l.b16 %v72
    %v107 = vunpack.c.l.b16 %v73
    %v108 = vunpack.c.l.b16 %v74
    %v109 = vpack.c.b16 %v104, %v103
    %v110 = vpack.c.b16 %v106, %v105
    %v111 = vpack.c.b16 %v108, %v107
    %vm115 = vcmask 392192
    %v117 = vsel %vm115, %v94, 0
    %v120 = vsel %vm115, %v95, 0
    %v123 = vsel %vm115, %v96, 0
    %125 = vmatprep.subr.bf16.mxu0 0
    %126 = vmatpush1.bf16.msra.mxu0 %v109
    %127 = vmatprep.subr.bf16.mxu0 0
    %128 = vmatpush1.bf16.msra.mxu0 %v110
    %129 = vmatprep.subr.bf16.mxu0 0
    %130 = vmatpush1.bf16.msra.mxu0 %v111
    %131 = vmatprep.subr.bf16.mxu0 0
    %132 = vmatpush1.bf16.msra.mxu0 0
    %133 = vmatprep.subr.bf16.mxu0 0
    %134 = vmatpush1.bf16.msra.mxu0 0
    %135 = vmatprep.subr.bf16.mxu0 0
    %136 = vmatpush1.bf16.msra.mxu0 0
    %137 = vmatprep.subr.bf16.mxu0 0
    %138 = vmatpush1.bf16.msra.mxu0 0
    %139 = vmatprep.subr.bf16.mxu0 0
    %140 = vmatpush1.bf16.msra.mxu0 0
    %141 = vmatprep.subr.bf16.mxu0 0
    %142 = vmatpush1.bf16.msra.mxu0 0
    %143 = vmatprep.subr.bf16.mxu0 0
    %144 = vmatpush1.bf16.msra.mxu0 0
    %145 = vmatprep.subr.bf16.mxu0 0
    %146 = vmatpush1.bf16.msra.mxu0 0
    %147 = vmatprep.subr.bf16.mxu0 0
    %148 = vmatpush1.bf16.msra.mxu0 0
    %149 = vmatprep.subr.bf16.mxu0 0
    %150 = vmatpush1.bf16.msra.mxu0 0
    %151 = vmatprep.subr.bf16.mxu0 0
    %152 = vmatpush1.bf16.msra.mxu0 0
    %153 = vmatprep.subr.bf16.mxu0 0
    %154 = vmatpush1.bf16.msra.mxu0 0
    %155 = vmatprep.subr.bf16.mxu0 0
    %156 = vmatpush1.bf16.msra.mxu0 0
    %157 = vmatprep.mubr.bf16.mxu0 0
    %158 = vmatmul.mubr.bf16.gmra.mrb[0].mxu0 %v117
    %v159 = vpop.f32.mrb[0].mxu0
    %v160 = vadd.f32 %v80, %v159
    %v161 = vpop.f32.mrb[0].mxu0
    %v162 = vpop.f32.mrb[0].mxu0
    %v163 = vadd.f32 %v80, %v162
    %v164 = vpop.f32.mrb[0].mxu0
    %165 = vmatprep.mubr.bf16.mxu0 0
    %166 = vmatmul.mubr.bf16.gmra.mrb[0].mxu0 %v120
    %v167 = vpop.f32.mrb[0].mxu0
    %v168 = vadd.f32 %v80, %v167
    %v169 = vpop.f32.mrb[0].mxu0
    %v170 = vpop.f32.mrb[0].mxu0
    %v171 = vadd.f32 %v80, %v170
    %v172 = vpop.f32.mrb[0].mxu0
    %173 = vmatprep.mubr.bf16.mxu0 0
    %174 = vmatmul.mubr.bf16.gmra.mrb[0].mxu0 %v123
    %v175 = vpop.f32.mrb[0].mxu0
    %v176 = vadd.f32 %v80, %v175
    %v177 = vpop.f32.mrb[0].mxu0
    %v178 = vpop.f32.mrb[0].mxu0
    %v179 = vadd.f32 %v80, %v178
    %v180 = vpop.f32.mrb[0].mxu0
    %181 = vdwg.mxu0
    %v182 = vld [vmem:[#allocation7] sm:$0xf]
    %v183 = vld [vmem:[#allocation7 + $0x4] sm:$0xf]
    %v184 = vld [vmem:[#allocation7 + $0x8] sm:$0xf]
    %v185 = vld [vmem:[#allocation7 + $0xc] sm:$0xf]
    %v186 = vld [vmem:[#allocation7 + $0x10] sm:$0xf]
    %v187 = vld [vmem:[#allocation7 + $0x14] sm:$0xf]
    %v188 = vld [vmem:[%s4] sm:$0x1]
    %v190 = vlaneseq
    %v191 = vshrl.u32 %v190, 7
    %v192 = vsub.s32 0, %v191
    %v193 = vrot.slane %v188, %v192
    %v201 = vunpack.c.l.b16 %v182
    %v202 = vunpack.c.l.b16 %v183
    %v203 = vunpack.c.l.b16 %v184
    %v204 = vunpack.c.l.b16 %v185
    %v205 = vunpack.c.l.b16 %v186
    %v206 = vunpack.c.l.b16 %v187
    %v207 = vpack.c.b16 %v202, %v201
    %v208 = vpack.c.b16 %v204, %v203
    %v209 = vpack.c.b16 %v206, %v205
    %213 = vmatprep.subr.bf16.mxu0 0
    %214 = vmatpush1.bf16.msra.mxu0 %v207
    %215 = vmatprep.subr.bf16.mxu0 0
    %216 = vmatpush1.bf16.msra.mxu0 %v208
    %217 = vmatprep.subr.bf16.mxu0 0
    %218 = vmatpush1.bf16.msra.mxu0 %v209
    %219 = vmatprep.subr.bf16.mxu0 0
    %220 = vmatpush1.bf16.msra.mxu0 0
    %221 = vmatprep.subr.bf16.mxu0 0
    %222 = vmatpush1.bf16.msra.mxu0 0
    %223 = vmatprep.subr.bf16.mxu0 0
    %224 = vmatpush1.bf16.msra.mxu0 0
    %225 = vmatprep.subr.bf16.mxu0 0
    %226 = vmatpush1.bf16.msra.mxu0 0
    %227 = vmatprep.subr.bf16.mxu0 0
    %228 = vmatpush1.bf16.msra.mxu0 0
    %229 = vmatprep.subr.bf16.mxu0 0
    %230 = vmatpush1.bf16.msra.mxu0 0
    %231 = vmatprep.subr.bf16.mxu0 0
    %232 = vmatpush1.bf16.msra.mxu0 0
    %233 = vmatprep.subr.bf16.mxu0 0
    %234 = vmatpush1.bf16.msra.mxu0 0
    %235 = vmatprep.subr.bf16.mxu0 0
    %236 = vmatpush1.bf16.msra.mxu0 0
    %237 = vmatprep.subr.bf16.mxu0 0
    %238 = vmatpush1.bf16.msra.mxu0 0
    %239 = vmatprep.subr.bf16.mxu0 0
    %240 = vmatpush1.bf16.msra.mxu0 0
    %241 = vmatprep.subr.bf16.mxu0 0
    %242 = vmatpush1.bf16.msra.mxu0 0
    %243 = vmatprep.subr.bf16.mxu0 0
    %244 = vmatpush1.bf16.msra.mxu0 0
    %245 = vmatprep.mubr.bf16.mxu0 0
    %246 = vmatmul.mubr.bf16.gmra.mrb[0].mxu0 %v117
    %v247 = vpop.f32.mrb[0].mxu0
    %v248 = vadd.f32 %v193, %v247
    %v249 = vpop.f32.mrb[0].mxu0
    %v250 = vpop.f32.mrb[0].mxu0
    %v251 = vadd.f32 %v193, %v250
    %v252 = vpop.f32.mrb[0].mxu0
    %253 = vmatprep.mubr.bf16.mxu0 0
    %254 = vmatmul.mubr.bf16.gmra.mrb[0].mxu0 %v120
    %v255 = vpop.f32.mrb[0].mxu0
    %v256 = vadd.f32 %v193, %v255
    %v257 = vpop.f32.mrb[0].mxu0
    %v258 = vpop.f32.mrb[0].mxu0
    %v259 = vadd.f32 %v193, %v258
    %v260 = vpop.f32.mrb[0].mxu0
    %261 = vmatprep.mubr.bf16.mxu0 0
    %262 = vmatmul.mubr.bf16.gmra.mrb[0].mxu0 %v123
    %v263 = vpop.f32.mrb[0].mxu0
    %v264 = vadd.f32 %v193, %v263
    %v265 = vpop.f32.mrb[0].mxu0
    %v266 = vpop.f32.mrb[0].mxu0
    %v267 = vadd.f32 %v193, %v266
    %v268 = vpop.f32.mrb[0].mxu0
    %269 = vdwg.mxu0
    %v270 = vxor.u32 %v248, 2147483648
    %v271 = vxor.u32 %v251, 2147483648
    %v272 = vxor.u32 %v256, 2147483648
    %v273 = vxor.u32 %v259, 2147483648
    %v274 = vxor.u32 %v264, 2147483648
    %v275 = vxor.u32 %v267, 2147483648
    %v276 = vmul.f32 %v270, 1.442695
    %v277 = vpow.pop %v276
    %v278 = vmul.f32 %v271, 1.442695
    %v279 = vpow.pop %v278
    %v280 = vmul.f32 %v272, 1.442695
    %v281 = vpow.pop %v280
    %v282 = vmul.f32 %v273, 1.442695
    %v283 = vpow.pop %v282
    %v284 = vmul.f32 %v274, 1.442695
    %v285 = vpow.pop %v284
    %v286 = vmul.f32 %v275, 1.442695
    %v287 = vpow.pop %v286
    %v288 = vadd.f32 %v277, 1.0
    %v289 = vadd.f32 %v279, 1.0
    %v290 = vadd.f32 %v281, 1.0
    %v291 = vadd.f32 %v283, 1.0
    %v292 = vadd.f32 %v285, 1.0
    %v293 = vadd.f32 %v287, 1.0
    %v294 = vrcp.pop %v288
    %v295 = vmul.f32 1.0, %v294
    %v296 = vrcp.pop %v289
    %v297 = vmul.f32 1.0, %v296
    %v298 = vrcp.pop %v290
    %v299 = vmul.f32 1.0, %v298
    %v300 = vrcp.pop %v291
    %v301 = vmul.f32 1.0, %v300
    %v302 = vrcp.pop %v292
    %v303 = vmul.f32 1.0, %v302
    %v304 = vrcp.pop %v293
    %v305 = vmul.f32 1.0, %v304
    %v306 = vadd.f32 %v160, %v295
    %v307 = vadd.f32 %v163, %v297
    %v308 = vadd.f32 %v168, %v299
    %v309 = vadd.f32 %v171, %v301
    %v310 = vadd.f32 %v176, %v303
    %v311 = vadd.f32 %v179, %v305
    %v312 = vmax.f32 %v306, 0.0
    %v313 = vmax.f32 %v307, 0.0
    %v314 = vmax.f32 %v308, 0.0
    %v315 = vmax.f32 %v309, 0.0
    %v316 = vmax.f32 %v310, 0.0
    %v317 = vmax.f32 %v311, 0.0
    %318 = vst [vmem:[#allocation8] sm:$0xff] %v312
    %319 = vst [vmem:[#allocation8 + $0x8] sm:$0xff] %v313
    %320 = vst [vmem:[#allocation8 + $0x10] sm:$0xff] %v314
    %321 = vst [vmem:[#allocation8 + $0x18] sm:$0xff] %v315
    %322 = vst [vmem:[#allocation8 + $0x20] sm:$0xff] %v316
    %323 = vst [vmem:[#allocation8 + $0x28] sm:$0xff] %v317
    // Predicated region
    $region34: #{tpu_custom_call.1} parent=1 // pred_check
      _
    $region35: #{tpu_custom_call.1} parent=1 // pred_check_branch
      %325 = sbr.rel (0) target = $region37
    $region36: #{tpu_custom_call.1} parent=1 // pred_region
      %s327 = ssub.s32 768, 768
      %328 = vsyncadd [#allocation4], %s327
      %s329 = sshll.u32 [#allocation8], 4
      %s330 = int_to_ptr.vmem [resolvable:$true] %s329
      %335 = dma.vmem_to_hbm [thread:$0]  %s330, 768, %s5, [#allocation4], 128, 128, 8
    $region37: #{tpu_custom_call.1} parent=1 // pred_fallthru
      _
    // Predicated region
    $region38: #{tpu_custom_call.1} parent=1 // pred_check
      _
    $region39: #{tpu_custom_call.1} parent=1 // pred_check_branch
      %337 = sbr.rel (0) target = $region41
    $region40: #{tpu_custom_call.1} parent=1 // pred_region
      %338 = dma.done [#allocation4], 768
    $region41: #{tpu_custom_call.1} parent=1 // pred_fallthru
      _
    %339 = vsyncpa [#allocation3], 1
    %340 = vsyncpa [#allocation6], 1
    %341 = vsyncpa [#allocation4], 1

</llo_original>
